<compile_context>
chip_gen: v6e
topology: v6e:2x2x1
jax: 0.10.0
libtpu: 0.0.40
codegen_flags: <defaults>
</compile_context>

<pallas_src>
import functools

import numpy as np
import jax
import jax.numpy as jnp
from jax.experimental import pallas as pl
from jax.experimental.pallas import tpu as pltpu


# ---------------------------------------------------------------------------
# In-kernel pooling helpers (flat last axis, element spacing `stride`).
# ---------------------------------------------------------------------------
def _pool2_fill(v, stride, n, m_odd):
    """Filled 2-window maxima: r[i] = max over the aligned 2-window holding i.

    Roll wrap-around only contaminates positions that the parity fill
    overwrites, because the tiled extent is a multiple of 4*stride.
    """
    a = jnp.maximum(v, pltpu.roll(v, (-stride) % n, axis=1))
    return jnp.where(m_odd, pltpu.roll(a, stride % n, axis=1), a)


def _pool4_from2(a, stride, n, m_hi):
    """Extend filled 2-window maxima `a` to filled 4-window maxima."""
    c = jnp.maximum(a, pltpu.roll(a, (-2 * stride) % n, axis=1))
    return jnp.where(m_hi, pltpu.roll(c, (2 * stride) % n, axis=1), c)


def _msc_kernel(x_ref, w0_ref, w1_ref, w2_ref, b_ref, m_ref, o_ref, *, width):
    # x_ref: (1, C, HWT)  w*: (C, C)  b: (C, 1)  m: (4, HWT) int32  o: (1, C, HWT)
    x = x_ref[0]
    shape = x.shape                      # (C, HWT), static
    hwt = shape[1]

    # Resident, host-precomputed parity masks: 32-bit sublane broadcast + one
    # compare each (no iota / integer divide at (C, HWT) per grid step).
    def row_mask(i):
        return jnp.broadcast_to(m_ref[i:i + 1], shape) != 0

    m_w_odd, m_w_hi, m_h_odd, m_h_hi = (row_mask(i) for i in range(4))

    # Base branch.
    y = jnp.dot(w0_ref[...], x, preferred_element_type=jnp.float32)

    # H-direction 2-window stage, shared by both pooled branches.  These rolls
    # shift by `width` on the lane-flat axis; when W % 128 == 0 they are
    # near-free vreg re-indexing on the XLU.
    a_h = _pool2_fill(x, width, hwt, m_h_odd)

    # up(maxpool2(x)): W-direction 2-window on top of the shared H stage.
    x1 = _pool2_fill(a_h, 1, hwt, m_w_odd)
    y = y + jnp.dot(w1_ref[...], x1, preferred_element_type=jnp.float32)

    # up(maxpool4(x)): extend the shared H stage to 4-windows, then pool W.
    c_h = _pool4_from2(a_h, width, hwt, m_h_hi)
    x2 = _pool4_from2(_pool2_fill(c_h, 1, hwt, m_w_odd), 1, hwt, m_w_hi)
    y = y + jnp.dot(w2_ref[...], x2, preferred_element_type=jnp.float32)

    y = y + b_ref[...]
    o_ref[0] = jnp.maximum(y, 0.0).astype(o_ref.dtype)


# ---------------------------------------------------------------------------
# Host-side helpers.
# ---------------------------------------------------------------------------
def _make_masks(h_t, W):
    """Parity masks for one (h_t, W) tile, flattened to (4, h_t*W) int32.

    Rows: [W-odd (2-window upper half), W-hi (4-window upper half), H-odd,
    H-hi].  Tiles start on 4-row boundaries and W % 4 == 0, so the same masks
    are valid for every tile.
    """
    idx = np.arange(h_t * W, dtype=np.int32)
    row = idx // W
    masks = np.stack([
        (idx % 2) == 1,
        (idx % 4) >= 2,
        (row % 2) == 1,
        (row % 4) >= 2,
    ]).astype(np.int32)
    return jnp.asarray(masks)


def _vmem_capacity_bytes():
    try:
        return int(pltpu.get_tpu_info().vmem_capacity_bytes)
    except Exception:
        return 64 << 20          # conservative (v7x-class) if the query fails


def _pick_h_tile(C, H, W, itemsize, budget_bytes):
    """Largest H tile that (a) divides H, (b) is a multiple of 4 so pooling is
    tile-local, (c) keeps lane-dense blocks (H_t*W % 128 == 0 unless full), and
    (d) keeps one (C, H_t*W) tile under `budget_bytes`."""
    candidates = [
        ht for ht in range(4, H + 1, 4)
        if H % ht == 0 and (ht == H or (ht * W) % 128 == 0)
    ]
    if not candidates:
        return H
    fitting = [ht for ht in candidates if C * ht * W * itemsize <= budget_bytes]
    return max(fitting) if fitting else min(candidates)


def _working_set_bytes(C, h_t, W, itemsize, n_weight_bufs):
    """Rough per-core VMEM footprint: double-buffered in/out tiles, ~6
    f32-sized pooled/accumulator temporaries, resident weights/bias/masks."""
    tile = C * h_t * W * itemsize
    f32_tile = C * h_t * W * 4
    weights = (3 * C * C + C) * 4 * n_weight_bufs
    masks = 4 * h_t * W * 4 * n_weight_bufs
    return 4 * tile + 6 * f32_tile + weights + masks


def _resident_block(shape, single_buffer):
    """Resident operand (constant index_map -> loaded once, never re-DMA'd).
    For large C, single-buffer it so the saved VMEM can go to bigger
    activation tiles (v7x: 64 MiB VMEM)."""
    index_map = lambda n, t: (0,) * len(shape)
    if single_buffer:
        return pl.BlockSpec(shape, index_map, pipeline_mode=pl.Buffered(1))
    return pl.BlockSpec(shape, index_map)


def msc_forward(x, w, b):
    """MSC forward.  x: (N, C, H, W); w: (C, 3C) 1x1-conv weight; b: (C,).

    The kernel is HBM-bound for typical C; callers may pass bf16 x/w for ~2x
    on the memory roofline (dots still accumulate in f32 and the output keeps
    x's dtype).  The demo stays in f32 to match the PyTorch reference.
    """
    N, C, H, W = x.shape
    assert H % 4 == 0 and W % 4 == 0, "spatial dims must be divisible by 4"
    assert w.shape == (C, 3 * C) and b.shape == (C,)

    itemsize = jnp.dtype(x.dtype).itemsize

    # Per-generation VMEM plan (v5e/v6e: 128 MiB physical; v7x: 64 MiB).
    vmem_cap = _vmem_capacity_bytes()
    if vmem_cap >= (100 << 20):
        budget, vmem_limit = 4 << 20, 64 << 20
    else:
        budget, vmem_limit = 2 << 20, 48 << 20
    vmem_limit = min(vmem_limit, (vmem_cap * 3) // 4)

    # Single-buffer the resident operands only when they are big enough for
    # the saved VMEM to matter (per v7x review item; weights at small C are
    # negligible so the default double-buffering is kept there).
    single_buffer = C >= 256
    n_weight_bufs = 1 if single_buffer else 2

    h_t = _pick_h_tile(C, H, W, itemsize, budget)
    if _working_set_bytes(C, h_t, W, itemsize, n_weight_bufs) > vmem_limit:
        h_t = _pick_h_tile(C, H, W, itemsize, 0)          # smallest legal tile
        if _working_set_bytes(C, h_t, W, itemsize, n_weight_bufs) > vmem_limit:
            raise ValueError(
                f"MSC tile (C={C}, h_t={h_t}, W={W}) does not fit the scoped "
                f"VMEM limit of {vmem_limit} bytes; reduce C or W.")
    hwt = h_t * W
    grid = (N, H // h_t)

    x_flat = x.reshape(N, C, H * W)              # free row-major reshape
    w0, w1, w2 = w[:, :C], w[:, C:2 * C], w[:, 2 * C:]
    b2 = b.reshape(C, 1)
    masks = _make_masks(h_t, W)                  # (4, hwt) int32, resident

    kernel = functools.partial(_msc_kernel, width=W)

    out = pl.pallas_call(
        kernel,
        out_shape=jax.ShapeDtypeStruct((N, C, H * W), x.dtype),
        grid=grid,
        in_specs=[
            pl.BlockSpec((1, C, hwt), lambda n, t: (n, 0, t)),
            _resident_block((C, C), single_buffer),
            _resident_block((C, C), single_buffer),
            _resident_block((C, C), single_buffer),
            _resident_block((C, 1), single_buffer),
            _resident_block((4, hwt), single_buffer),
        ],
        out_specs=pl.BlockSpec((1, C, hwt), lambda n, t: (n, 0, t)),
        compiler_params=pltpu.CompilerParams(
            dimension_semantics=("parallel", "parallel"),
            vmem_limit_bytes=int(vmem_limit),
        ),
    )(x_flat, w0, w1, w2, b2, masks)
    return out.reshape(N, C, H, W)


def msc_ref(x, w, b):
    """Pure-JAX reference matching the PyTorch MSC forward."""
    N, C, H, W = x.shape

    def pool_up(v, k):
        p = v.reshape(N, C, H // k, k, W // k, k).max(axis=(3, 5))
        return jnp.repeat(jnp.repeat(p, k, axis=2), k, axis=3)

    cat = jnp.concatenate([x, pool_up(x, 2), pool_up(x, 4)], axis=1)
    y = jnp.einsum("oc,nchw->nohw", w, cat) + b[None, :, None, None]
    return jnp.maximum(y, 0.0)


if __name__ == "__main__":
    key = jax.random.PRNGKey(0)
    kx, kw, kb = jax.random.split(key, 3)
    N, C, H, W = 2, 4, 16, 16

    x = jax.random.normal(kx, (N, C, H, W), jnp.float32)
    # Conv2d(3*C, C, kernel_size=1): weight (C, 3C, 1, 1) -> (C, 3C), bias (C,)
    w = jax.random.normal(kw, (C, 3 * C), jnp.float32) * 0.1
    b = jax.random.normal(kb, (C,), jnp.float32) * 0.1

    out = jax.block_until_ready(jax.jit(msc_forward)(x, w, b))
    ref = msc_ref(x, w, b)

    assert out.shape == (N, C, H, W)
    err = float(jnp.max(jnp.abs(out - ref)))
    if err > 1e-4:
        raise AssertionError(f"kernel/reference mismatch, max abs err = {err}")
    print("KERNEL_OK")
</pallas_src>

<mosaic_0001>
module attributes {stable_mosaic.version = 11 : i64} {
  func.func @_msc_kernel(%arg0: i32, %arg1: i32, %arg2: memref<1x4x256xf32, #tpu.memory_space<vmem>>, %arg3: memref<4x4xf32, #tpu.memory_space<vmem>>, %arg4: memref<4x4xf32, #tpu.memory_space<vmem>>, %arg5: memref<4x4xf32, #tpu.memory_space<vmem>>, %arg6: memref<4x1xf32, #tpu.memory_space<vmem>>, %arg7: memref<4x256xi32, #tpu.memory_space<vmem>>, %arg8: memref<1x4x256xf32, #tpu.memory_space<vmem>>) attributes {dimension_semantics = [#tpu.dimension_semantics<parallel>, #tpu.dimension_semantics<parallel>], iteration_bounds = array<i64: 2, 1>, scalar_prefetch = 0 : i64, scratch_operands = 0 : i64, tpu.core_type = #tpu.core_type<tc>, window_params = [{transform_indices = @transform_0, window_bounds = array<i64: 1, 4, 256>}, {pipeline_mode = #tpu.pipeline_mode<synchronous>, transform_indices = @transform_1, window_bounds = array<i64: 4, 4>}, {pipeline_mode = #tpu.pipeline_mode<synchronous>, transform_indices = @transform_2, window_bounds = array<i64: 4, 4>}, {pipeline_mode = #tpu.pipeline_mode<synchronous>, transform_indices = @transform_3, window_bounds = array<i64: 4, 4>}, {pipeline_mode = #tpu.pipeline_mode<synchronous>, transform_indices = @transform_4, window_bounds = array<i64: 4, 1>}, {pipeline_mode = #tpu.pipeline_mode<synchronous>, transform_indices = @transform_5, window_bounds = array<i64: 4, 256>}, {transform_indices = @transform_6, window_bounds = array<i64: 1, 4, 256>}]} {
    %c0 = arith.constant 0 : index
    %c0_0 = arith.constant 0 : index
    %c0_1 = arith.constant 0 : index
    %0 = vector.load %arg2[%c0, %c0_0, %c0_1] : memref<1x4x256xf32, #tpu.memory_space<vmem>>, vector<1x4x256xf32>
    %1 = vector.shape_cast %0 : vector<1x4x256xf32> to vector<4x256xf32>
    %c0_2 = arith.constant 0 : index
    %c0_3 = arith.constant 0 : index
    %2 = vector.load %arg7[%c0_2, %c0_3] : memref<4x256xi32, #tpu.memory_space<vmem>>, vector<1x256xi32>
    %3 = vector.shape_cast %2 : vector<1x256xi32> to vector<1x256xi32>
    %4 = vector.broadcast %3 : vector<1x256xi32> to vector<4x256xi32>
    %c0_i32 = arith.constant 0 : i32
    %5 = vector.broadcast %c0_i32 : i32 to vector<4x256xi32>
    %6 = arith.cmpi ne, %4, %5 : vector<4x256xi32>
    %c1 = arith.constant 1 : index
    %c0_4 = arith.constant 0 : index
    %7 = vector.load %arg7[%c1, %c0_4] : memref<4x256xi32, #tpu.memory_space<vmem>>, vector<1x256xi32>
    %8 = vector.shape_cast %7 : vector<1x256xi32> to vector<1x256xi32>
    %9 = vector.broadcast %8 : vector<1x256xi32> to vector<4x256xi32>
    %c0_i32_5 = arith.constant 0 : i32
    %10 = vector.broadcast %c0_i32_5 : i32 to vector<4x256xi32>
    %11 = arith.cmpi ne, %9, %10 : vector<4x256xi32>
    %c2 = arith.constant 2 : index
    %c0_6 = arith.constant 0 : index
    %12 = vector.load %arg7[%c2, %c0_6] : memref<4x256xi32, #tpu.memory_space<vmem>>, vector<1x256xi32>
    %13 = vector.shape_cast %12 : vector<1x256xi32> to vector<1x256xi32>
    %14 = vector.broadcast %13 : vector<1x256xi32> to vector<4x256xi32>
    %c0_i32_7 = arith.constant 0 : i32
    %15 = vector.broadcast %c0_i32_7 : i32 to vector<4x256xi32>
    %16 = arith.cmpi ne, %14, %15 : vector<4x256xi32>
    %c3 = arith.constant 3 : index
    %c0_8 = arith.constant 0 : index
    %17 = vector.load %arg7[%c3, %c0_8] : memref<4x256xi32, #tpu.memory_space<vmem>>, vector<1x256xi32>
    %18 = vector.shape_cast %17 : vector<1x256xi32> to vector<1x256xi32>
    %19 = vector.broadcast %18 : vector<1x256xi32> to vector<4x256xi32>
    %c0_i32_9 = arith.constant 0 : i32
    %20 = vector.broadcast %c0_i32_9 : i32 to vector<4x256xi32>
    %21 = arith.cmpi ne, %19, %20 : vector<4x256xi32>
    %c0_10 = arith.constant 0 : index
    %c0_11 = arith.constant 0 : index
    %22 = vector.load %arg3[%c0_10, %c0_11] : memref<4x4xf32, #tpu.memory_space<vmem>>, vector<4x4xf32>
    %cst = arith.constant dense<0.000000e+00> : vector<4x256xf32>
    %23 = tpu.matmul %22, %1, %cst {dimension_numbers = #tpu.dot_dimension_numbers<[1], [0], [0], [1], [0, 0, 1, 1], [], []>} : vector<4x4xf32>, vector<4x256xf32>, vector<4x256xf32> -> vector<4x256xf32>
    %c240_i32 = arith.constant 240 : i32
    %24 = tpu.dynamic_rotate %1 by %c240_i32 dim 1 : vector<4x256xf32>, i32 -> vector<4x256xf32>
    %25 = arith.maximumf %1, %24 : vector<4x256xf32>
    %c16_i32 = arith.constant 16 : i32
    %26 = tpu.dynamic_rotate %25 by %c16_i32 dim 1 : vector<4x256xf32>, i32 -> vector<4x256xf32>
    %27 = arith.select %16, %26, %25 : vector<4x256xi1>, vector<4x256xf32>
    %c255_i32 = arith.constant 255 : i32
    %28 = tpu.dynamic_rotate %27 by %c255_i32 dim 1 : vector<4x256xf32>, i32 -> vector<4x256xf32>
    %29 = arith.maximumf %27, %28 : vector<4x256xf32>
    %c1_i32 = arith.constant 1 : i32
    %30 = tpu.dynamic_rotate %29 by %c1_i32 dim 1 : vector<4x256xf32>, i32 -> vector<4x256xf32>
    %31 = arith.select %6, %30, %29 : vector<4x256xi1>, vector<4x256xf32>
    %c0_12 = arith.constant 0 : index
    %c0_13 = arith.constant 0 : index
    %32 = vector.load %arg4[%c0_12, %c0_13] : memref<4x4xf32, #tpu.memory_space<vmem>>, vector<4x4xf32>
    %cst_14 = arith.constant dense<0.000000e+00> : vector<4x256xf32>
    %33 = tpu.matmul %32, %31, %cst_14 {dimension_numbers = #tpu.dot_dimension_numbers<[1], [0], [0], [1], [0, 0, 1, 1], [], []>} : vector<4x4xf32>, vector<4x256xf32>, vector<4x256xf32> -> vector<4x256xf32>
    %34 = arith.addf %23, %33 : vector<4x256xf32>
    %c224_i32 = arith.constant 224 : i32
    %35 = tpu.dynamic_rotate %27 by %c224_i32 dim 1 : vector<4x256xf32>, i32 -> vector<4x256xf32>
    %36 = arith.maximumf %27, %35 : vector<4x256xf32>
    %c32_i32 = arith.constant 32 : i32
    %37 = tpu.dynamic_rotate %36 by %c32_i32 dim 1 : vector<4x256xf32>, i32 -> vector<4x256xf32>
    %38 = arith.select %21, %37, %36 : vector<4x256xi1>, vector<4x256xf32>
    %c255_i32_15 = arith.constant 255 : i32
    %39 = tpu.dynamic_rotate %38 by %c255_i32_15 dim 1 : vector<4x256xf32>, i32 -> vector<4x256xf32>
    %40 = arith.maximumf %38, %39 : vector<4x256xf32>
    %c1_i32_16 = arith.constant 1 : i32
    %41 = tpu.dynamic_rotate %40 by %c1_i32_16 dim 1 : vector<4x256xf32>, i32 -> vector<4x256xf32>
    %42 = arith.select %6, %41, %40 : vector<4x256xi1>, vector<4x256xf32>
    %c254_i32 = arith.constant 254 : i32
    %43 = tpu.dynamic_rotate %42 by %c254_i32 dim 1 : vector<4x256xf32>, i32 -> vector<4x256xf32>
    %44 = arith.maximumf %42, %43 : vector<4x256xf32>
    %c2_i32 = arith.constant 2 : i32
    %45 = tpu.dynamic_rotate %44 by %c2_i32 dim 1 : vector<4x256xf32>, i32 -> vector<4x256xf32>
    %46 = arith.select %11, %45, %44 : vector<4x256xi1>, vector<4x256xf32>
    %c0_17 = arith.constant 0 : index
    %c0_18 = arith.constant 0 : index
    %47 = vector.load %arg5[%c0_17, %c0_18] : memref<4x4xf32, #tpu.memory_space<vmem>>, vector<4x4xf32>
    %cst_19 = arith.constant dense<0.000000e+00> : vector<4x256xf32>
    %48 = tpu.matmul %47, %46, %cst_19 {dimension_numbers = #tpu.dot_dimension_numbers<[1], [0], [0], [1], [0, 0, 1, 1], [], []>} : vector<4x4xf32>, vector<4x256xf32>, vector<4x256xf32> -> vector<4x256xf32>
    %49 = arith.addf %34, %48 : vector<4x256xf32>
    %c0_20 = arith.constant 0 : index
    %c0_21 = arith.constant 0 : index
    %50 = vector.load %arg6[%c0_20, %c0_21] : memref<4x1xf32, #tpu.memory_space<vmem>>, vector<4x1xf32>
    %51 = vector.broadcast %50 : vector<4x1xf32> to vector<4x256xf32>
    %52 = arith.addf %49, %51 : vector<4x256xf32>
    %cst_22 = arith.constant 0.000000e+00 : f32
    %53 = vector.broadcast %cst_22 : f32 to vector<4x256xf32>
    %54 = arith.maximumf %52, %53 : vector<4x256xf32>
    %c0_23 = arith.constant 0 : index
    %c0_24 = arith.constant 0 : index
    %c0_25 = arith.constant 0 : index
    %55 = vector.load %arg8[%c0_23, %c0_24, %c0_25] : memref<1x4x256xf32, #tpu.memory_space<vmem>>, vector<1x4x256xf32>
    %56 = vector.shape_cast %55 : vector<1x4x256xf32> to vector<4x256xf32>
    %57 = vector.shape_cast %54 : vector<4x256xf32> to vector<1x4x256xf32>
    tpu.vector_store %arg8[%c0_23, %c0_24, %c0_25], %57 {strides = array<i32>} : memref<1x4x256xf32, #tpu.memory_space<vmem>>, vector<1x4x256xf32>,
    return
  }
  func.func @transform_0(%arg0: i32, %arg1: i32) -> (i32, i32, i32) {
    %c0_i32 = arith.constant 0 : i32
    %c0_i32_0 = arith.constant 0 : i32
    return %arg0, %c0_i32, %arg1 : i32, i32, i32
  }
  func.func @transform_1(%arg0: i32, %arg1: i32) -> (i32, i32) {
    %c0_i32 = arith.constant 0 : i32
    %c0_i32_0 = arith.constant 0 : i32
    %c0_i32_1 = arith.constant 0 : i32
    return %c0_i32, %c0_i32_0 : i32, i32
  }
  func.func @transform_2(%arg0: i32, %arg1: i32) -> (i32, i32) {
    %c0_i32 = arith.constant 0 : i32
    %c0_i32_0 = arith.constant 0 : i32
    %c0_i32_1 = arith.constant 0 : i32
    return %c0_i32, %c0_i32_0 : i32, i32
  }
  func.func @transform_3(%arg0: i32, %arg1: i32) -> (i32, i32) {
    %c0_i32 = arith.constant 0 : i32
    %c0_i32_0 = arith.constant 0 : i32
    %c0_i32_1 = arith.constant 0 : i32
    return %c0_i32, %c0_i32_0 : i32, i32
  }
  func.func @transform_4(%arg0: i32, %arg1: i32) -> (i32, i32) {
    %c0_i32 = arith.constant 0 : i32
    %c0_i32_0 = arith.constant 0 : i32
    %c0_i32_1 = arith.constant 0 : i32
    return %c0_i32, %c0_i32_0 : i32, i32
  }
  func.func @transform_5(%arg0: i32, %arg1: i32) -> (i32, i32) {
    %c0_i32 = arith.constant 0 : i32
    %c0_i32_0 = arith.constant 0 : i32
    %c0_i32_1 = arith.constant 0 : i32
    return %c0_i32, %c0_i32_0 : i32, i32
  }
  func.func @transform_6(%arg0: i32, %arg1: i32) -> (i32, i32, i32) {
    %c0_i32 = arith.constant 0 : i32
    %c0_i32_0 = arith.constant 0 : i32
    return %arg0, %c0_i32, %arg1 : i32, i32, i32
  }
}

</mosaic_0001>

<llo_original>
// kernel: msc_forward.1
$region0: #{msc_forward.1}
  #allocation0 [shape = 'u32[]', space=smem, size = 0x4, offset = 0x4, fixed_abs, tag = 'smem constant byte address 0x4 - core index']
  #allocation1 [shape = 'u32[144,128]{1,0:T(1,128)}', space=vmem, size = 0x12000, scoped, tag = 'internal scratch']
  %s0 = inlined_call_operand.vmem [shape: f32[2,4,256], index: 0, kind: input, shape index: {}]
  %s1 = inlined_call_operand.vmem [shape: f32[4,4], index: 1, kind: input, shape index: {}]
  %s2 = inlined_call_operand.vmem [shape: f32[4,4], index: 2, kind: input, shape index: {}]
  %s3 = inlined_call_operand.vmem [shape: f32[4,4], index: 3, kind: input, shape index: {}]
  %s4 = inlined_call_operand.vmem [shape: f32[4,1], index: 4, kind: input, shape index: {}]
  %s5 = inlined_call_operand.vmem [shape: s32[4,256], index: 5, kind: input, shape index: {}]
  %s6 = inlined_call_operand.vmem [shape: f32[2,4,256], index: 6, kind: output, shape index: {}]
  %s7 = sld [smem:[#allocation0]]
  $region57: #{msc_forward.1} parent=0
    _
  %s9 = ssub.s32 1, %s7
  %s10 = scalar_select 0, %s9, %s7
  loop: start=0, step=1, limit=4
  $region2: #{msc_forward.1} parent=0 // loop_pre_header
    _
  $region3: #{msc_forward.1} parent=0 // loop_header
    %s12 = sphi 0, %s16
    %p13 = scmp.ge.s32.totalorder %s12, 4
    %s19 = sphi 0, %s31
    %s20 = sphi 0, %s27
    %s21 = sphi 0, %s19
    %s22 = sphi 0, %s20
    %s23 = sphi 0, %s21
    %s24 = sphi 0, %s22
    %s36 = sphi 0, %s38
    %s39 = sphi 0, %s36
    %s40 = sphi 0, %s39
    %s56 = sphi 0, %s40
    %s60 = sphi 0, %s60
    %s62 = sphi 0, %s60
    %s63 = sphi 0, %s62
    %s77 = sphi 0, %s63
    %s81 = sphi 0, %s81
    %s83 = sphi 0, %s81
    %s84 = sphi 0, %s83
    %s98 = sphi 0, %s84
    %s102 = sphi 0, %s102
    %s104 = sphi 0, %s102
    %s105 = sphi 0, %s104
    %s119 = sphi 0, %s105
    %s123 = sphi 0, %s123
    %s125 = sphi 0, %s123
    %s126 = sphi 0, %s125
    %s140 = sphi 0, %s126
    %s144 = sphi 0, %s144
    %s146 = sphi 0, %s144
    %s147 = sphi 0, %s146
    %s161 = sphi 0, %s147
    %s169 = sphi 0, %s171
    %s172 = sphi 0, %s169
    %s173 = sphi 0, %s172
    %s189 = sphi 0, %s173
  $region4: #{msc_forward.1} parent=0 // loop_header_branch
    %15 = sbr.rel (%p13) target = $region8
  $region5: #{msc_forward.1} parent=0 // loop_body
    %s17 = ssub.s32 %s12, 1
    %s18 = ssub.s32 %s12, 2
    %s25 = sadd.s32 1, %s20
    %p26 = scmp.ge.s32.totalorder %s25, 1
    %s27 = scalar_select %p26, 0, %s25
    %s28 = sadd.s32 1, %s19
    %s29 = scalar_select %p26, %s28, %s19
    %p30 = scmp.ge.s32.totalorder %s29, 2
    %s31 = scalar_select %p30, 0, %s29
    %s32 = ssub.s32 %s19, %s31
    %s33 = ssub.s32 %s20, %s27
    %s34 = sor.u32 %s32, %s33
    %p35 = scmp.eq.s32.totalorder %s34, 0
    %s37 = sadd.s32 %s36, 1
    %s38 = scalar_select %p35, %s36, %s37
    %p41 = pneg %p35
    %p42 = scmp.eq.s32.totalorder %s12, 1
    %p43 = por %p41, %p42
    %p44 = scmp.ne.s32.totalorder %s36, %s39
    %p45 = scmp.eq.s32.totalorder %s12, 0
    %p46 = por %p44, %p45
    %p47 = scmp.ne.s32.totalorder %s36, %s39
    %p48 = scmp.eq.s32.totalorder %s17, 1
    %p49 = por %p47, %p48
    %p50 = scmp.ne.s32.totalorder %s39, %s40
    %p51 = scmp.eq.s32.totalorder %s17, 0
    %p52 = por %p50, %p51
    %p53 = scmp.ne.s32.totalorder %s39, %s40
    %p54 = scmp.eq.s32.totalorder %s18, 1
    %p55 = por %p53, %p54
    %p57 = scmp.ne.s32.totalorder %s40, %s56
    %p58 = scmp.eq.s32.totalorder %s18, 0
    %p59 = por %p57, %p58
    %s61 = sadd.s32 %s60, 1
    %p64 = scmp.eq.s32.totalorder %s12, 1
    %p65 = scmp.ne.s32.totalorder %s60, %s62
    %p66 = scmp.eq.s32.totalorder %s12, 0
    %p67 = por %p65, %p66
    %p68 = scmp.ne.s32.totalorder %s60, %s62
    %p69 = scmp.eq.s32.totalorder %s17, 1
    %p70 = por %p68, %p69
    %p71 = scmp.ne.s32.totalorder %s62, %s63
    %p72 = scmp.eq.s32.totalorder %s17, 0
    %p73 = por %p71, %p72
    %p74 = scmp.ne.s32.totalorder %s62, %s63
    %p75 = scmp.eq.s32.totalorder %s18, 1
    %p76 = por %p74, %p75
    %p78 = scmp.ne.s32.totalorder %s63, %s77
    %p79 = scmp.eq.s32.totalorder %s18, 0
    %p80 = por %p78, %p79
    %s82 = sadd.s32 %s81, 1
    %p85 = scmp.eq.s32.totalorder %s12, 1
    %p86 = scmp.ne.s32.totalorder %s81, %s83
    %p87 = scmp.eq.s32.totalorder %s12, 0
    %p88 = por %p86, %p87
    %p89 = scmp.ne.s32.totalorder %s81, %s83
    %p90 = scmp.eq.s32.totalorder %s17, 1
    %p91 = por %p89, %p90
    %p92 = scmp.ne.s32.totalorder %s83, %s84
    %p93 = scmp.eq.s32.totalorder %s17, 0
    %p94 = por %p92, %p93
    %p95 = scmp.ne.s32.totalorder %s83, %s84
    %p96 = scmp.eq.s32.totalorder %s18, 1
    %p97 = por %p95, %p96
    %p99 = scmp.ne.s32.totalorder %s84, %s98
    %p100 = scmp.eq.s32.totalorder %s18, 0
    %p101 = por %p99, %p100
    %s103 = sadd.s32 %s102, 1
    %p106 = scmp.eq.s32.totalorder %s12, 1
    %p107 = scmp.ne.s32.totalorder %s102, %s104
    %p108 = scmp.eq.s32.totalorder %s12, 0
    %p109 = por %p107, %p108
    %p110 = scmp.ne.s32.totalorder %s102, %s104
    %p111 = scmp.eq.s32.totalorder %s17, 1
    %p112 = por %p110, %p111
    %p113 = scmp.ne.s32.totalorder %s104, %s105
    %p114 = scmp.eq.s32.totalorder %s17, 0
    %p115 = por %p113, %p114
    %p116 = scmp.ne.s32.totalorder %s104, %s105
    %p117 = scmp.eq.s32.totalorder %s18, 1
    %p118 = por %p116, %p117
    %p120 = scmp.ne.s32.totalorder %s105, %s119
    %p121 = scmp.eq.s32.totalorder %s18, 0
    %p122 = por %p120, %p121
    %s124 = sadd.s32 %s123, 1
    %p127 = scmp.eq.s32.totalorder %s12, 1
    %p128 = scmp.ne.s32.totalorder %s123, %s125
    %p129 = scmp.eq.s32.totalorder %s12, 0
    %p130 = por %p128, %p129
    %p131 = scmp.ne.s32.totalorder %s123, %s125
    %p132 = scmp.eq.s32.totalorder %s17, 1
    %p133 = por %p131, %p132
    %p134 = scmp.ne.s32.totalorder %s125, %s126
    %p135 = scmp.eq.s32.totalorder %s17, 0
    %p136 = por %p134, %p135
    %p137 = scmp.ne.s32.totalorder %s125, %s126
    %p138 = scmp.eq.s32.totalorder %s18, 1
    %p139 = por %p137, %p138
    %p141 = scmp.ne.s32.totalorder %s126, %s140
    %p142 = scmp.eq.s32.totalorder %s18, 0
    %p143 = por %p141, %p142
    %s145 = sadd.s32 %s144, 1
    %p148 = scmp.eq.s32.totalorder %s12, 1
    %p149 = scmp.ne.s32.totalorder %s144, %s146
    %p150 = scmp.eq.s32.totalorder %s12, 0
    %p151 = por %p149, %p150
    %p152 = scmp.ne.s32.totalorder %s144, %s146
    %p153 = scmp.eq.s32.totalorder %s17, 1
    %p154 = por %p152, %p153
    %p155 = scmp.ne.s32.totalorder %s146, %s147
    %p156 = scmp.eq.s32.totalorder %s17, 0
    %p157 = por %p155, %p156
    %p158 = scmp.ne.s32.totalorder %s146, %s147
    %p159 = scmp.eq.s32.totalorder %s18, 1
    %p160 = por %p158, %p159
    %p162 = scmp.ne.s32.totalorder %s147, %s161
    %p163 = scmp.eq.s32.totalorder %s18, 0
    %p164 = por %p162, %p163
    %s165 = ssub.s32 %s19, %s31
    %s166 = ssub.s32 %s20, %s27
    %s167 = sor.u32 %s165, %s166
    %p168 = scmp.eq.s32.totalorder %s167, 0
    %s170 = sadd.s32 %s169, 1
    %s171 = scalar_select %p168, %s169, %s170
    %p174 = pneg %p168
    %p175 = scmp.eq.s32.totalorder %s12, 1
    %p176 = por %p174, %p175
    %p177 = scmp.ne.s32.totalorder %s169, %s172
    %p178 = scmp.eq.s32.totalorder %s12, 0
    %p179 = por %p177, %p178
    %p180 = scmp.ne.s32.totalorder %s169, %s172
    %p181 = scmp.eq.s32.totalorder %s17, 1
    %p182 = por %p180, %p181
    %p183 = scmp.ne.s32.totalorder %s172, %s173
    %p184 = scmp.eq.s32.totalorder %s17, 0
    %p185 = por %p183, %p184
    %p186 = scmp.ne.s32.totalorder %s172, %s173
    %p187 = scmp.eq.s32.totalorder %s18, 1
    %p188 = por %p186, %p187
    %p190 = scmp.ne.s32.totalorder %s173, %s189
    %p191 = scmp.eq.s32.totalorder %s18, 0
    %p192 = por %p190, %p191
    %p193 = scmp.le.s32.totalorder 1, %s12
    %p194 = scmp.lt.s32.totalorder %s12, 3
    %p195 = pnand %p193, %p194
    %p196 = pneg %p195
    // Predicated region
    $region9: #{msc_forward.1} parent=5 // pred_check
      _
    $region10: #{msc_forward.1} parent=5 // pred_check_branch
      %198 = sbr.rel (%p195) target = $region12
    $region11: #{msc_forward.1} parent=5 // pred_region
      %s199 = ssub.s32 %s12, 1
      // Predicated region
      $region13: #{msc_forward.1} parent=11 // pred_check
        %p200 = pneg %p73
      $region14: #{msc_forward.1} parent=11 // pred_check_branch
        %202 = sbr.rel (%p200) target = $region16
      $region15: #{msc_forward.1} parent=11 // pred_region
        _
      $region16: #{msc_forward.1} parent=11 // pred_fallthru
        _
      // Predicated region
      $region17: #{msc_forward.1} parent=11 // pred_check
        %p203 = pneg %p94
      $region18: #{msc_forward.1} parent=11 // pred_check_branch
        %205 = sbr.rel (%p203) target = $region20
      $region19: #{msc_forward.1} parent=11 // pred_region
        _
      $region20: #{msc_forward.1} parent=11 // pred_fallthru
        _
      // Predicated region
      $region21: #{msc_forward.1} parent=11 // pred_check
        %p206 = pneg %p115
      $region22: #{msc_forward.1} parent=11 // pred_check_branch
        %208 = sbr.rel (%p206) target = $region24
      $region23: #{msc_forward.1} parent=11 // pred_region
        _
      $region24: #{msc_forward.1} parent=11 // pred_fallthru
        _
      // Predicated region
      $region25: #{msc_forward.1} parent=11 // pred_check
        %p209 = pneg %p136
      $region26: #{msc_forward.1} parent=11 // pred_check_branch
        %211 = sbr.rel (%p209) target = $region28
      $region27: #{msc_forward.1} parent=11 // pred_region
        _
      $region28: #{msc_forward.1} parent=11 // pred_fallthru
        _
      // Predicated region
      $region29: #{msc_forward.1} parent=11 // pred_check
        %p212 = pneg %p157
      $region30: #{msc_forward.1} parent=11 // pred_check_branch
        %214 = sbr.rel (%p212) target = $region32
      $region31: #{msc_forward.1} parent=11 // pred_region
        _
      $region32: #{msc_forward.1} parent=11 // pred_fallthru
        _
    $region12: #{msc_forward.1} parent=5 // pred_fallthru
      _
    %p215 = scmp.lt.s32.totalorder %s12, 2
    // Predicated region
    $region33: #{msc_forward.1} parent=5 // pred_check
      %p216 = pneg %p215
    $region34: #{msc_forward.1} parent=5 // pred_check_branch
      %218 = sbr.rel (%p216) target = $region36
    $region35: #{msc_forward.1} parent=5 // pred_region
      // Predicated region
      $region37: #{msc_forward.1} parent=35 // pred_check
        %p219 = pneg %p46
      $region38: #{msc_forward.1} parent=35 // pred_check_branch
        %221 = sbr.rel (%p219) target = $region40
      $region39: #{msc_forward.1} parent=35 // pred_region
        %s222 = smul.u32 2, %s20
        %p223 = scmp.lt.s32.totalorder %s19, 1
        %s224 = scalar_select %p223, %s19, 1
        %p225 = scmp.lt.s32.totalorder %s222, 1
        %s226 = scalar_select %p225, %s222, 1
        %s227 = smul.addr %s224, 2
        %s228 = sadd.s32 %s226, %s227
        %s229 = smul.addr %s228, 4
        %s230 = scalar_lea.vmem %s0, %s229
        %s231 = smul.u32 2, %s20
      $region40: #{msc_forward.1} parent=35 // pred_fallthru
        _
    $region36: #{msc_forward.1} parent=5 // pred_fallthru
      _
    %p232 = scmp.le.s32.totalorder 1, %s12
    %p233 = scmp.lt.s32.totalorder %s12, 3
    %p234 = pnand %p232, %p233
    %p235 = pneg %p234
    // Predicated region
    $region41: #{msc_forward.1} parent=5 // pred_check
      _
    $region42: #{msc_forward.1} parent=5 // pred_check_branch
      %237 = sbr.rel (%p234) target = $region44
    $region43: #{msc_forward.1} parent=5 // pred_region
      %s238 = ssub.s32 %s12, 1
      %s239 = smul.u32 2, %s22
      %p240 = scmp.lt.s32.totalorder %s21, 1
      %s241 = scalar_select %p240, %s21, 1
      %p242 = scmp.lt.s32.totalorder %s239, 1
      %s243 = scalar_select %p242, %s239, 1
      %s244 = smul.addr %s241, 2
      %s245 = sadd.s32 %s243, %s244
      %s246 = smul.addr %s245, 4
      %s247 = scalar_lea.vmem %s0, %s246
      %p248 = pneg %p52
      %p249 = pneg %p49
      %p250 = pneg %p73
      %p251 = pneg %p70
      %p252 = pneg %p94
      %p253 = pneg %p91
      %p254 = pneg %p115
      %p255 = pneg %p112
      %p256 = pneg %p136
      %p257 = pneg %p133
      %p258 = pneg %p157
      %p259 = pneg %p154
      %p260 = pneg %p185
      %p261 = pneg %p182
      %s262 = smul.u32 2, %s22
      %p263 = scmp.lt.s32.totalorder %s21, 1
      %s264 = scalar_select %p263, %s21, 1
      %p265 = scmp.lt.s32.totalorder %s262, 1
      %s266 = scalar_select %p265, %s262, 1
      %s267 = smul.addr %s264, 2
      %s268 = sadd.s32 %s266, %s267
      %s269 = smul.addr %s268, 4
      %s270 = scalar_lea.vmem %s6, %s269
      %s271 = smul.u32 2, %s22
      %p272 = scmp.lt.s32.totalorder %s21, 1
      %s273 = scalar_select %p272, %s21, 1
      %p274 = scmp.lt.s32.totalorder %s271, 1
      %s275 = scalar_select %p274, %s271, 1
      %s276 = smul.addr %s273, 2
      %s277 = sadd.s32 %s275, %s276
      %s278 = smul.addr %s277, 4
      %s279 = scalar_lea.vmem %s0, %s278
      %s280 = smul.u32 2, %s22
      %s281 = smul.u32 2, %s22
      %p282 = scmp.lt.s32.totalorder %s21, 1
      %s283 = scalar_select %p282, %s21, 1
      %p284 = scmp.lt.s32.totalorder %s281, 1
      %s285 = scalar_select %p284, %s281, 1
      %s286 = smul.addr %s283, 2
      %s287 = sadd.s32 %s285, %s286
      %s288 = smul.addr %s287, 4
      %s289 = scalar_lea.vmem %s6, %s288
      %s290 = smul.u32 2, %s22
      %v291 = vld [vmem:[%s279] sm:$0xff]
      %v292 = vld [vmem:[%s5] ss:$4 sm:$0x3]
      %v293 = vlaneseq
      %v294 = vshrl.u32 %v293, 7
      %v295 = vsub.s32 0, %v294
      %v296 = vrot.slane %v292, %v295
      %v297 = vlaneseq
      %v298 = vshrl.u32 %v297, 7
      %v299 = vsub.s32 1, %v298
      %v300 = vrot.slane %v292, %v299
      %vm301 = vcmp.ne.s32.totalorder %v296, 0
      %vm302 = vcmp.ne.s32.totalorder %v300, 0
      %s303 = scalar_lea.vmem %s5, 1
      %v304 = vld [vmem:[%s303] ss:$4 sm:$0x3]
      %v305 = vlaneseq
      %v306 = vshrl.u32 %v305, 7
      %v307 = vsub.s32 0, %v306
      %v308 = vrot.slane %v304, %v307
      %v309 = vlaneseq
      %v310 = vshrl.u32 %v309, 7
      %v311 = vsub.s32 1, %v310
      %v312 = vrot.slane %v304, %v311
      %vm313 = vcmp.ne.s32.totalorder %v308, 0
      %vm314 = vcmp.ne.s32.totalorder %v312, 0
      %s315 = scalar_lea.vmem %s5, 2
      %v316 = vld [vmem:[%s315] ss:$4 sm:$0x3]
      %v317 = vlaneseq
      %v318 = vshrl.u32 %v317, 7
      %v319 = vsub.s32 0, %v318
      %v320 = vrot.slane %v316, %v319
      %v321 = vlaneseq
      %v322 = vshrl.u32 %v321, 7
      %v323 = vsub.s32 1, %v322
      %v324 = vrot.slane %v316, %v323
      %vm325 = vcmp.ne.s32.totalorder %v320, 0
      %vm326 = vcmp.ne.s32.totalorder %v324, 0
      %s327 = scalar_lea.vmem %s5, 3
      %v328 = vld [vmem:[%s327] ss:$4 sm:$0x3]
      %v329 = vlaneseq
      %v330 = vshrl.u32 %v329, 7
      %v331 = vsub.s32 0, %v330
      %v332 = vrot.slane %v328, %v331
      %v333 = vlaneseq
      %v334 = vshrl.u32 %v333, 7
      %v335 = vsub.s32 1, %v334
      %v336 = vrot.slane %v328, %v335
      %vm337 = vcmp.ne.s32.totalorder %v332, 0
      %vm338 = vcmp.ne.s32.totalorder %v336, 0
      %v339 = vld [vmem:[%s1] sm:$0xf]
      %v341 = vcombine.high %v291, %v291
      %343 = vrot.lane.b32.xlu0 %v291, 112
      %v344 = vpop.permute.xlu0 %343
      %345 = vrot.lane.b32.xlu0 %v341, 112
      %v346 = vpop.permute.xlu0 %345
      %v347 = vlaneseq
      %v348 = vand.u32 %v347, 127
      %vm349 = vcmp.lt.s32.totalorder %v348, 112
      %v350 = vsel %vm349, %v344, %v346
      %v351 = vsel %vm349, %v346, %v344
      %v354 = vcombine.low %v350, %v351
      %v356 = vmax.f32 %v291, %v354
      %v358 = vcombine.high %v356, %v356
      %360 = vrot.lane.b32.xlu0 %v356, 16
      %v361 = vpop.permute.xlu0 %360
      %362 = vrot.lane.b32.xlu0 %v358, 16
      %v363 = vpop.permute.xlu0 %362
      %vm364 = vcmp.lt.s32.totalorder %v348, 16
      %v365 = vsel %vm364, %v361, %v363
      %v366 = vsel %vm364, %v363, %v361
      %v367 = vsel %vm325, %v366, %v356
      %v368 = vsel %vm326, %v365, %v358
      %369 = vrot.lane.b32.xlu0 %v367, 127
      %v370 = vpop.permute.xlu0 %369
      %371 = vrot.lane.b32.xlu0 %v368, 127
      %v372 = vpop.permute.xlu0 %371
      %vm373 = vcmp.lt.s32.totalorder %v348, 127
      %v374 = vsel %vm373, %v370, %v372
      %v375 = vsel %vm373, %v372, %v370
      %v376 = vmax.f32 %v367, %v374
      %v377 = vmax.f32 %v368, %v375
      %378 = vrot.lane.b32.xlu0 %v376, 1
      %v379 = vpop.permute.xlu0 %378
      %380 = vrot.lane.b32.xlu0 %v377, 1
      %v381 = vpop.permute.xlu0 %380
      %vm382 = vcmp.lt.s32.totalorder %v348, 1
      %v383 = vsel %vm382, %v379, %v381
      %v384 = vsel %vm382, %v381, %v379
      %v385 = vsel %vm301, %v384, %v376
      %v386 = vsel %vm302, %v383, %v377
      %v387 = vld [vmem:[%s2] sm:$0xf]
      %vm388 = vcmask 31744
      %v390 = vsel %vm388, %v387, 0
      %vm392 = vcmask 1043456
      %v394 = vsel %vm392, %v385, 0
      %v397 = vsel %vm392, %v386, 0
      %399 = vmatprep.subr.mxu0 0.0
      %400 = vmatpush1.msra.mxu0 0.0
      %401 = vmatprep.subr.mxu0 0.0
      %402 = vmatpush1.msra.mxu0 0.0
      %403 = vmatprep.subr.mxu0 0.0
      %404 = vmatpush1.msra.mxu0 0.0
      %405 = vmatprep.subr.mxu0 0.0
      %406 = vmatpush1.msra.mxu0 0.0
      %407 = vmatprep.subr.mxu0 0.0
      %408 = vmatpush1.msra.mxu0 0.0
      %409 = vmatprep.subr.mxu0 0.0
      %410 = vmatpush1.msra.mxu0 0.0
      %411 = vmatprep.subr.mxu0 0.0
      %412 = vmatpush1.msra.mxu0 0.0
      %413 = vmatprep.subr.mxu0 0.0
      %414 = vmatpush1.msra.mxu0 0.0
      %415 = vmatprep.subr.mxu0 0.0
      %416 = vmatpush1.msra.mxu0 0.0
      %417 = vmatprep.subr.mxu0 0.0
      %418 = vmatpush1.msra.mxu0 0.0
      %419 = vmatprep.subr.mxu0 0.0
      %420 = vmatpush1.msra.mxu0 0.0
      %421 = vmatprep.subr.mxu0 0.0
      %422 = vmatpush1.msra.mxu0 0.0
      %423 = vmatprep.subr.mxu0 0.0
      %424 = vmatpush1.msra.mxu0 0.0
      %425 = vmatprep.subr.mxu0 0.0
      %426 = vmatpush1.msra.mxu0 0.0
      %427 = vmatprep.subr.mxu0 0.0
      %428 = vmatpush1.msra.mxu0 0.0
      %429 = vmatprep.subr.mxu0 %v397
      %430 = vmatpush1.msra.mxu0 %v394
      %431 = vmatprep.subr.mxu0 0.0
      %432 = vmatpush2.msra.mxu0 0.0
      %433 = vmatprep.subr.mxu0 0.0
      %434 = vmatpush2.msra.mxu0 0.0
      %435 = vmatprep.subr.mxu0 0.0
      %436 = vmatpush2.msra.mxu0 0.0
      %437 = vmatprep.subr.mxu0 0.0
      %438 = vmatpush2.msra.mxu0 0.0
      %439 = vmatprep.subr.mxu0 0.0
      %440 = vmatpush2.msra.mxu0 0.0
      %441 = vmatprep.subr.mxu0 0.0
      %442 = vmatpush2.msra.mxu0 0.0
      %443 = vmatprep.subr.mxu0 0.0
      %444 = vmatpush2.msra.mxu0 0.0
      %445 = vmatprep.subr.mxu0 0.0
      %446 = vmatpush2.msra.mxu0 0.0
      %447 = vmatprep.subr.mxu0 0.0
      %448 = vmatpush2.msra.mxu0 0.0
      %449 = vmatprep.subr.mxu0 0.0
      %450 = vmatpush2.msra.mxu0 0.0
      %451 = vmatprep.subr.mxu0 0.0
      %452 = vmatpush2.msra.mxu0 0.0
      %453 = vmatprep.subr.mxu0 0.0
      %454 = vmatpush2.msra.mxu0 0.0
      %455 = vmatprep.subr.mxu0 0.0
      %456 = vmatpush2.msra.mxu0 0.0
      %457 = vmatprep.subr.mxu0 0.0
      %458 = vmatpush2.msra.mxu0 0.0
      %459 = vmatprep.subr.mxu0 0.0
      %460 = vmatpush2.msra.mxu0 0.0
      %461 = vmatprep.subr.mxu0 0.0
      %462 = vmatpush2.msra.mxu0 0.0
      %463 = vmatprep.mubr.f32.mxu0 0.0
      %464 = vmatmul.mubr.f32.gmra.mxu0 %v390
      %v465 = vpop.f32.mrf.mxu0
      %v466 = vadd.f32 0.0, %v465
      %v467 = vpop.f32.mrf.mxu0
      %v468 = vadd.f32 0.0, %v467
      %469 = vdwg.mxu0
      %v471 = vsel %vm388, %v339, 0
      %v473 = vsel %vm392, %v291, 0
      %v475 = vsel %vm392, %v341, 0
      %477 = vmatprep.subr.mxu0 0.0
      %478 = vmatpush1.msra.mxu0 0.0
      %479 = vmatprep.subr.mxu0 0.0
      %480 = vmatpush1.msra.mxu0 0.0
      %481 = vmatprep.subr.mxu0 0.0
      %482 = vmatpush1.msra.mxu0 0.0
      %483 = vmatprep.subr.mxu0 0.0
      %484 = vmatpush1.msra.mxu0 0.0
      %485 = vmatprep.subr.mxu0 0.0
      %486 = vmatpush1.msra.mxu0 0.0
      %487 = vmatprep.subr.mxu0 0.0
      %488 = vmatpush1.msra.mxu0 0.0
      %489 = vmatprep.subr.mxu0 0.0
      %490 = vmatpush1.msra.mxu0 0.0
      %491 = vmatprep.subr.mxu0 0.0
      %492 = vmatpush1.msra.mxu0 0.0
      %493 = vmatprep.subr.mxu0 0.0
      %494 = vmatpush1.msra.mxu0 0.0
      %495 = vmatprep.subr.mxu0 0.0
      %496 = vmatpush1.msra.mxu0 0.0
      %497 = vmatprep.subr.mxu0 0.0
      %498 = vmatpush1.msra.mxu0 0.0
      %499 = vmatprep.subr.mxu0 0.0
      %500 = vmatpush1.msra.mxu0 0.0
      %501 = vmatprep.subr.mxu0 0.0
      %502 = vmatpush1.msra.mxu0 0.0
      %503 = vmatprep.subr.mxu0 0.0
      %504 = vmatpush1.msra.mxu0 0.0
      %505 = vmatprep.subr.mxu0 0.0
      %506 = vmatpush1.msra.mxu0 0.0
      %507 = vmatprep.subr.mxu0 %v475
      %508 = vmatpush1.msra.mxu0 %v473
      %509 = vmatprep.subr.mxu0 0.0
      %510 = vmatpush2.msra.mxu0 0.0
      %511 = vmatprep.subr.mxu0 0.0
      %512 = vmatpush2.msra.mxu0 0.0
      %513 = vmatprep.subr.mxu0 0.0
      %514 = vmatpush2.msra.mxu0 0.0
      %515 = vmatprep.subr.mxu0 0.0
      %516 = vmatpush2.msra.mxu0 0.0
      %517 = vmatprep.subr.mxu0 0.0
      %518 = vmatpush2.msra.mxu0 0.0
      %519 = vmatprep.subr.mxu0 0.0
      %520 = vmatpush2.msra.mxu0 0.0
      %521 = vmatprep.subr.mxu0 0.0
      %522 = vmatpush2.msra.mxu0 0.0
      %523 = vmatprep.subr.mxu0 0.0
      %524 = vmatpush2.msra.mxu0 0.0
      %525 = vmatprep.subr.mxu0 0.0
      %526 = vmatpush2.msra.mxu0 0.0
      %527 = vmatprep.subr.mxu0 0.0
      %528 = vmatpush2.msra.mxu0 0.0
      %529 = vmatprep.subr.mxu0 0.0
      %530 = vmatpush2.msra.mxu0 0.0
      %531 = vmatprep.subr.mxu0 0.0
      %532 = vmatpush2.msra.mxu0 0.0
      %533 = vmatprep.subr.mxu0 0.0
      %534 = vmatpush2.msra.mxu0 0.0
      %535 = vmatprep.subr.mxu0 0.0
      %536 = vmatpush2.msra.mxu0 0.0
      %537 = vmatprep.subr.mxu0 0.0
      %538 = vmatpush2.msra.mxu0 0.0
      %539 = vmatprep.subr.mxu0 0.0
      %540 = vmatpush2.msra.mxu0 0.0
      %541 = vmatprep.mubr.f32.mxu0 0.0
      %542 = vmatmul.mubr.f32.gmra.mxu0 %v471
      %v543 = vpop.f32.mrf.mxu0
      %v544 = vadd.f32 %v466, %v543
      %v545 = vpop.f32.mrf.mxu0
      %v546 = vadd.f32 %v468, %v545
      %547 = vdwg.mxu0
      %548 = vrot.lane.b32.xlu0 %v367, 96
      %v549 = vpop.permute.xlu0 %548
      %550 = vrot.lane.b32.xlu0 %v368, 96
      %v551 = vpop.permute.xlu0 %550
      %vm552 = vcmp.lt.s32.totalorder %v348, 96
      %v553 = vsel %vm552, %v549, %v551
      %v554 = vsel %vm552, %v551, %v549
      %v555 = vmax.f32 %v367, %v553
      %v556 = vmax.f32 %v368, %v554
      %557 = vrot.lane.b32.xlu0 %v555, 32
      %v558 = vpop.permute.xlu0 %557
      %559 = vrot.lane.b32.xlu0 %v556, 32
      %v560 = vpop.permute.xlu0 %559
      %vm561 = vcmp.lt.s32.totalorder %v348, 32
      %v562 = vsel %vm561, %v558, %v560
      %v563 = vsel %vm561, %v560, %v558
      %v564 = vsel %vm337, %v563, %v555
      %v565 = vsel %vm338, %v562, %v556
      %566 = vrot.lane.b32.xlu0 %v564, 127
      %v567 = vpop.permute.xlu0 %566
      %568 = vrot.lane.b32.xlu0 %v565, 127
      %v569 = vpop.permute.xlu0 %568
      %v570 = vsel %vm373, %v567, %v569
      %v571 = vsel %vm373, %v569, %v567
      %v572 = vmax.f32 %v564, %v570
      %v573 = vmax.f32 %v565, %v571
      %574 = vrot.lane.b32.xlu0 %v572, 1
      %v575 = vpop.permute.xlu0 %574
      %576 = vrot.lane.b32.xlu0 %v573, 1
      %v577 = vpop.permute.xlu0 %576
      %v578 = vsel %vm382, %v575, %v577
      %v579 = vsel %vm382, %v577, %v575
      %v580 = vsel %vm301, %v579, %v572
      %v581 = vsel %vm302, %v578, %v573
      %582 = vrot.lane.b32.xlu0 %v580, 126
      %v583 = vpop.permute.xlu0 %582
      %584 = vrot.lane.b32.xlu0 %v581, 126
      %v585 = vpop.permute.xlu0 %584
      %vm586 = vcmp.lt.s32.totalorder %v348, 126
      %v587 = vsel %vm586, %v583, %v585
      %v588 = vsel %vm586, %v585, %v583
      %v589 = vmax.f32 %v580, %v587
      %v590 = vmax.f32 %v581, %v588
      %591 = vrot.lane.b32.xlu0 %v589, 2
      %v592 = vpop.permute.xlu0 %591
      %593 = vrot.lane.b32.xlu0 %v590, 2
      %v594 = vpop.permute.xlu0 %593
      %vm595 = vcmp.lt.s32.totalorder %v348, 2
      %v596 = vsel %vm595, %v592, %v594
      %v597 = vsel %vm595, %v594, %v592
      %v598 = vsel %vm313, %v597, %v589
      %v599 = vsel %vm314, %v596, %v590
      %v600 = vld [vmem:[%s3] sm:$0xf]
      %v602 = vsel %vm388, %v600, 0
      %v605 = vsel %vm392, %v598, 0
      %v608 = vsel %vm392, %v599, 0
      %610 = vmatprep.subr.mxu0 0.0
      %611 = vmatpush1.msra.mxu0 0.0
      %612 = vmatprep.subr.mxu0 0.0
      %613 = vmatpush1.msra.mxu0 0.0
      %614 = vmatprep.subr.mxu0 0.0
      %615 = vmatpush1.msra.mxu0 0.0
      %616 = vmatprep.subr.mxu0 0.0
      %617 = vmatpush1.msra.mxu0 0.0
      %618 = vmatprep.subr.mxu0 0.0
      %619 = vmatpush1.msra.mxu0 0.0
      %620 = vmatprep.subr.mxu0 0.0
      %621 = vmatpush1.msra.mxu0 0.0
      %622 = vmatprep.subr.mxu0 0.0
      %623 = vmatpush1.msra.mxu0 0.0
      %624 = vmatprep.subr.mxu0 0.0
      %625 = vmatpush1.msra.mxu0 0.0
      %626 = vmatprep.subr.mxu0 0.0
      %627 = vmatpush1.msra.mxu0 0.0
      %628 = vmatprep.subr.mxu0 0.0
      %629 = vmatpush1.msra.mxu0 0.0
      %630 = vmatprep.subr.mxu0 0.0
      %631 = vmatpush1.msra.mxu0 0.0
      %632 = vmatprep.subr.mxu0 0.0
      %633 = vmatpush1.msra.mxu0 0.0
      %634 = vmatprep.subr.mxu0 0.0
      %635 = vmatpush1.msra.mxu0 0.0
      %636 = vmatprep.subr.mxu0 0.0
      %637 = vmatpush1.msra.mxu0 0.0
      %638 = vmatprep.subr.mxu0 0.0
      %639 = vmatpush1.msra.mxu0 0.0
      %640 = vmatprep.subr.mxu0 %v608
      %641 = vmatpush1.msra.mxu0 %v605
      %642 = vmatprep.subr.mxu0 0.0
      %643 = vmatpush2.msra.mxu0 0.0
      %644 = vmatprep.subr.mxu0 0.0
      %645 = vmatpush2.msra.mxu0 0.0
      %646 = vmatprep.subr.mxu0 0.0
      %647 = vmatpush2.msra.mxu0 0.0
      %648 = vmatprep.subr.mxu0 0.0
      %649 = vmatpush2.msra.mxu0 0.0
      %650 = vmatprep.subr.mxu0 0.0
      %651 = vmatpush2.msra.mxu0 0.0
      %652 = vmatprep.subr.mxu0 0.0
      %653 = vmatpush2.msra.mxu0 0.0
      %654 = vmatprep.subr.mxu0 0.0
      %655 = vmatpush2.msra.mxu0 0.0
      %656 = vmatprep.subr.mxu0 0.0
      %657 = vmatpush2.msra.mxu0 0.0
      %658 = vmatprep.subr.mxu0 0.0
      %659 = vmatpush2.msra.mxu0 0.0
      %660 = vmatprep.subr.mxu0 0.0
      %661 = vmatpush2.msra.mxu0 0.0
      %662 = vmatprep.subr.mxu0 0.0
      %663 = vmatpush2.msra.mxu0 0.0
      %664 = vmatprep.subr.mxu0 0.0
      %665 = vmatpush2.msra.mxu0 0.0
      %666 = vmatprep.subr.mxu0 0.0
      %667 = vmatpush2.msra.mxu0 0.0
      %668 = vmatprep.subr.mxu0 0.0
      %669 = vmatpush2.msra.mxu0 0.0
      %670 = vmatprep.subr.mxu0 0.0
      %671 = vmatpush2.msra.mxu0 0.0
      %672 = vmatprep.subr.mxu0 0.0
      %673 = vmatpush2.msra.mxu0 0.0
      %674 = vmatprep.mubr.f32.mxu0 0.0
      %675 = vmatmul.mubr.f32.gmra.mxu0 %v602
      %v676 = vpop.f32.mrf.mxu0
      %v677 = vadd.f32 0.0, %v676
      %v678 = vpop.f32.mrf.mxu0
      %v679 = vadd.f32 0.0, %v678
      %680 = vdwg.mxu0
      %v681 = vadd.f32 %v544, %v677
      %v682 = vadd.f32 %v546, %v679
      %v683 = vld [vmem:[%s4] sm:$0xf]
      %685 = vset.pattern.permute.xlu0 0
      %686 = vperm.xlu0 %685, %v683
      %v687 = vpop.permute.xlu0 %686
      %v689 = vadd.f32 %v681, %v687
      %v690 = vadd.f32 %v682, %v687
      %v691 = vmax.f32 %v689, 0.0
      %v692 = vmax.f32 %v690, 0.0
      %v695 = vcombine.low %v691, %v692
      %697 = vst [vmem:[%s289] sm:$0xff] %v695
      %s698 = smul.u32 2, %s22
      %p699 = scmp.lt.s32.totalorder %s21, 1
      %s700 = scalar_select %p699, %s21, 1
      %p701 = scmp.lt.s32.totalorder %s698, 1
      %s702 = scalar_select %p701, %s698, 1
      %s703 = smul.addr %s700, 2
      %s704 = sadd.s32 %s702, %s703
      %s705 = smul.addr %s704, 4
      %s706 = scalar_lea.vmem %s6, %s705
      // Predicated region
      $region45: #{msc_forward.1} parent=43 // pred_check
        %p707 = pneg %p182
      $region46: #{msc_forward.1} parent=43 // pred_check_branch
        %709 = sbr.rel (%p707) target = $region48
      $region47: #{msc_forward.1} parent=43 // pred_region
        %s710 = smul.u32 2, %s22
      $region48: #{msc_forward.1} parent=43 // pred_fallthru
        _
    $region44: #{msc_forward.1} parent=5 // pred_fallthru
      _
    %p711 = scmp.le.s32.totalorder 2, %s12
    // Predicated region
    $region49: #{msc_forward.1} parent=5 // pred_check
      %p712 = pneg %p711
    $region50: #{msc_forward.1} parent=5 // pred_check_branch
      %714 = sbr.rel (%p712) target = $region52
    $region51: #{msc_forward.1} parent=5 // pred_region
      %s715 = ssub.s32 %s12, 2
      // Predicated region
      $region53: #{msc_forward.1} parent=51 // pred_check
        %p716 = pneg %p188
      $region54: #{msc_forward.1} parent=51 // pred_check_branch
        %718 = sbr.rel (%p716) target = $region56
      $region55: #{msc_forward.1} parent=51 // pred_region
        %s719 = smul.u32 2, %s24
        %p720 = scmp.lt.s32.totalorder %s23, 1
        %s721 = scalar_select %p720, %s23, 1
        %p722 = scmp.lt.s32.totalorder %s719, 1
        %s723 = scalar_select %p722, %s719, 1
        %s724 = smul.addr %s721, 2
        %s725 = sadd.s32 %s723, %s724
        %s726 = smul.addr %s725, 4
        %s727 = scalar_lea.vmem %s6, %s726
      $region56: #{msc_forward.1} parent=51 // pred_fallthru
        _
    $region52: #{msc_forward.1} parent=5 // pred_fallthru
      _
  $region6: #{msc_forward.1} parent=0 // loop_footer
    %s16 = sadd.s32 1, %s12
  $region7: #{msc_forward.1} parent=0 // loop_footer_branch
    %11 = sbr.rel target = $region3
  $region8: #{msc_forward.1} parent=0 // loop_exit
    _

</llo_original>
